<compile_context>
chip_gen: v7x
topology: tpu7x:2x2x1
jax: 0.10.0
libtpu: 0.0.40
codegen_flags: <defaults>
</compile_context>

<pallas_src>
import functools

import jax
import jax.numpy as jnp
from jax import lax
from jax.experimental import pallas as pl
from jax.experimental.pallas import tpu as pltpu


def _round_up(x, m):
    return (x + m - 1) // m * m


def crd_loss_kernel(fs_ref, ft_ref, ws_ref, bs_ref, wt_ref, bt_ref, out_ref):
    # ---- Embed: bf16 MXU operands (cast in-kernel, no extra HBM pass), f32 accumulation ----
    es = jnp.dot(fs_ref[...].astype(jnp.bfloat16), ws_ref[...],
                 preferred_element_type=jnp.float32) + bs_ref[...]
    et = jnp.dot(ft_ref[...].astype(jnp.bfloat16), wt_ref[...],
                 preferred_element_type=jnp.float32) + bt_ref[...]

    # ---- Fused L2-normalized row-wise dot:
    #      dot(es/|es|, et/|et|) = rowdot(es, et) * rsqrt(|es|^2) * rsqrt(|et|^2)
    rd = jnp.sum(es * et, axis=1, keepdims=True)     # [tb, 1]
    ns2 = jnp.sum(es * es, axis=1, keepdims=True)    # [tb, 1]
    nt2 = jnp.sum(et * et, axis=1, keepdims=True)    # [tb, 1]

    # Per-row contribution; rsqrt goes to the EUP slot.  No masking here: padded batch rows
    # are never read by the wrapper (it slices [:B] before the final reduce).
    out_ref[...] = rd * lax.rsqrt(ns2) * lax.rsqrt(nt2)


def _choose_tb(B, s_pad, t_pad, f_pad, max_tb, vmem_budget_bytes):
    """Largest batch tile (multiple of 16, <= max_tb) whose VMEM footprint fits the budget."""
    # Resident weights/biases: default double-buffered by the pipeline (constant index map).
    fixed = 2 * ((s_pad + t_pad) * f_pad * 2 + 2 * f_pad * 4)

    def per_tb(tb):
        act = 2 * tb * (s_pad + t_pad) * 4      # double-buffered f32 activation tiles
        cast = tb * (s_pad + t_pad) * 2         # in-kernel bf16 casts of the activations
        emb = 2 * tb * f_pad * 4                # es / et f32
        prods = 3 * tb * f_pad * 4              # es*et, es*es, et*et temporaries (upper bound)
        out = 2 * tb * 4                        # double-buffered (tb, 1) output tile
        return act + cast + emb + prods + out

    tb = max(16, min(_round_up(max_tb, 16), _round_up(B, 16)))
    while tb > 16 and fixed + per_tb(tb) > vmem_budget_bytes:
        tb -= 16
    return tb


def crd_loss(f_s, f_t, w_s, b_s, w_t, b_t, *, max_tb=512):
    """f_s: [B, s_dim], f_t: [B, t_dim]; weights pre-transposed to [dim_in, feat_dim]."""
    B, s_dim = f_s.shape
    _, t_dim = f_t.shape
    feat_dim = w_s.shape[1]

    # --- Pad feature dim and contraction dims to multiples of 128 (exactly preserves result) ---
    f_pad = _round_up(feat_dim, 128)
    s_pad = _round_up(s_dim, 128)
    t_pad = _round_up(t_dim, 128)
    if f_pad != feat_dim:
        w_s = jnp.pad(w_s, ((0, 0), (0, f_pad - feat_dim)))
        w_t = jnp.pad(w_t, ((0, 0), (0, f_pad - feat_dim)))
        b_s = jnp.pad(b_s, ((0, 0), (0, f_pad - feat_dim)))
        b_t = jnp.pad(b_t, ((0, 0), (0, f_pad - feat_dim)))
    if s_pad != s_dim:
        f_s = jnp.pad(f_s, ((0, 0), (0, s_pad - s_dim)))
        w_s = jnp.pad(w_s, ((0, s_pad - s_dim), (0, 0)))
    if t_pad != t_dim:
        f_t = jnp.pad(f_t, ((0, 0), (0, t_pad - t_dim)))
        w_t = jnp.pad(w_t, ((0, t_pad - t_dim), (0, 0)))

    # --- Batch tiling under an explicit VMEM budget (fits v7x 64 MiB & v5e scoped limit). ---
    vmem_budget = 36 * 1024 * 1024
    vmem_limit = 48 * 1024 * 1024
    tb = _choose_tb(B, s_pad, t_pad, f_pad, max_tb, vmem_budget)
    b_pad = _round_up(B, tb)
    nb = b_pad // tb
    if b_pad != B:
        f_s = jnp.pad(f_s, ((0, b_pad - B), (0, 0)))
        f_t = jnp.pad(f_t, ((0, b_pad - B), (0, 0)))

    # --- Weights/biases cast once in the wrapper (small); activations stay f32 into the kernel. ---
    f_s32 = f_s.astype(jnp.float32)
    f_t32 = f_t.astype(jnp.float32)
    w_s16 = w_s.astype(jnp.bfloat16)
    w_t16 = w_t.astype(jnp.bfloat16)
    b_s32 = b_s.astype(jnp.float32)
    b_t32 = b_t.astype(jnp.float32)

    cost = pl.CostEstimate(
        flops=2 * B * (s_dim + t_dim) * feat_dim + 8 * B * feat_dim,
        transcendentals=2 * B,
        bytes_accessed=(b_pad * (s_pad + t_pad) * 4          # activation reads (f32)
                        + (s_pad + t_pad) * f_pad * 2        # weight reads (bf16)
                        + 2 * f_pad * 4                      # bias reads
                        + b_pad * 4),                        # per-row output writes
    )

    out = pl.pallas_call(
        crd_loss_kernel,
        out_shape=jax.ShapeDtypeStruct((b_pad, 1), jnp.float32),
        grid=(nb,),
        in_specs=[
            pl.BlockSpec((tb, s_pad), lambda i: (i, 0)),      # f_s tile (pipelined, f32)
            pl.BlockSpec((tb, t_pad), lambda i: (i, 0)),      # f_t tile (pipelined, f32)
            pl.BlockSpec((s_pad, f_pad), lambda i: (0, 0)),   # W_s (resident, bf16)
            pl.BlockSpec((1, f_pad), lambda i: (0, 0)),       # b_s (resident, f32)
            pl.BlockSpec((t_pad, f_pad), lambda i: (0, 0)),   # W_t (resident, bf16)
            pl.BlockSpec((1, f_pad), lambda i: (0, 0)),       # b_t (resident, f32)
        ],
        out_specs=pl.BlockSpec((tb, 1), lambda i: (i, 0)),    # per-row contributions
        compiler_params=pltpu.CompilerParams(
            dimension_semantics=("parallel",),                # no cross-step state -> megacore OK
            vmem_limit_bytes=vmem_limit,
        ),
        cost_estimate=cost,
    )(f_s32, f_t32, w_s16, b_s32, w_t16, b_t32)

    # ContrastLoss: -sum(diag(es_n @ et_n.T)) / bsz   (padded rows never read)
    loss = -jnp.sum(out[:B, 0]) / jnp.float32(B)
    # Match torch output shape [1]
    return loss.reshape((1,))


def reference(f_s, f_t, w_s, b_s, w_t, b_t):
    es = f_s @ w_s + b_s
    es = es / jnp.sqrt(jnp.sum(es ** 2, axis=1, keepdims=True))
    et = f_t @ w_t + b_t
    et = et / jnp.sqrt(jnp.sum(et ** 2, axis=1, keepdims=True))
    mul = es @ et.T
    return (-jnp.sum(jnp.diag(mul)) / f_s.shape[0]).reshape((1,))


if __name__ == "__main__":
    B, S_DIM, T_DIM, FEAT_DIM = 8, 32, 48, 16

    key = jax.random.PRNGKey(0)
    k1, k2, k3, k4, k5, k6 = jax.random.split(key, 6)

    f_s = jax.random.normal(k1, (B, S_DIM), dtype=jnp.float32)
    f_t = jax.random.normal(k2, (B, T_DIM), dtype=jnp.float32)

    # Deterministic "Linear" params (stored as [dim_in, feat_dim], i.e. W.T)
    w_s = jax.random.normal(k3, (S_DIM, FEAT_DIM), dtype=jnp.float32) * (1.0 / jnp.sqrt(S_DIM))
    b_s = jax.random.normal(k4, (1, FEAT_DIM), dtype=jnp.float32) * 0.01
    w_t = jax.random.normal(k5, (T_DIM, FEAT_DIM), dtype=jnp.float32) * (1.0 / jnp.sqrt(T_DIM))
    b_t = jax.random.normal(k6, (1, FEAT_DIM), dtype=jnp.float32) * 0.01

    loss = crd_loss(f_s, f_t, w_s, b_s, w_t, b_t)
    jax.block_until_ready(loss)

    ref = reference(f_s, f_t, w_s, b_s, w_t, b_t)
    # Kernel feeds the MXU with bf16 operands (f32 accumulation), so compare with
    # bf16-appropriate tolerance against the pure-f32 reference.
    assert jnp.allclose(loss, ref, rtol=5e-2, atol=2e-2), (loss, ref)
    assert loss.shape == (1,)

    print("KERNEL_OK")
</pallas_src>

<mosaic_0001>
module attributes {stable_mosaic.version = 11 : i64} {
  func.func @crd_loss_kernel(%arg0: i32, %arg1: memref<16x128xf32, #tpu.memory_space<vmem>>, %arg2: memref<16x128xf32, #tpu.memory_space<vmem>>, %arg3: memref<128x128xbf16, #tpu.memory_space<vmem>>, %arg4: memref<1x128xf32, #tpu.memory_space<vmem>>, %arg5: memref<128x128xbf16, #tpu.memory_space<vmem>>, %arg6: memref<1x128xf32, #tpu.memory_space<vmem>>, %arg7: memref<16x1xf32, #tpu.memory_space<vmem>>) attributes {dimension_semantics = [#tpu.dimension_semantics<parallel>], iteration_bounds = array<i64: 1>, scalar_prefetch = 0 : i64, scratch_operands = 0 : i64, tpu.core_type = #tpu.core_type<tc>, window_params = [{transform_indices = @transform_0, window_bounds = array<i64: 16, 128>}, {transform_indices = @transform_1, window_bounds = array<i64: 16, 128>}, {pipeline_mode = #tpu.pipeline_mode<synchronous>, transform_indices = @transform_2, window_bounds = array<i64: 128, 128>}, {pipeline_mode = #tpu.pipeline_mode<synchronous>, transform_indices = @transform_3, window_bounds = array<i64: 1, 128>}, {pipeline_mode = #tpu.pipeline_mode<synchronous>, transform_indices = @transform_4, window_bounds = array<i64: 128, 128>}, {pipeline_mode = #tpu.pipeline_mode<synchronous>, transform_indices = @transform_5, window_bounds = array<i64: 1, 128>}, {transform_indices = @transform_6, window_bounds = array<i64: 16, 1>}]} {
    %c0 = arith.constant 0 : index
    %c0_0 = arith.constant 0 : index
    %0 = vector.load %arg1[%c0, %c0_0] : memref<16x128xf32, #tpu.memory_space<vmem>>, vector<16x128xf32>
    %1 = arith.truncf %0 : vector<16x128xf32> to vector<16x128xbf16>
    %c0_1 = arith.constant 0 : index
    %c0_2 = arith.constant 0 : index
    %2 = vector.load %arg3[%c0_1, %c0_2] : memref<128x128xbf16, #tpu.memory_space<vmem>>, vector<128x128xbf16>
    %cst = arith.constant dense<0.000000e+00> : vector<16x128xf32>
    %3 = tpu.matmul %1, %2, %cst {dimension_numbers = #tpu.dot_dimension_numbers<[1], [0], [0], [1], [0, 0, 1, 1], [], []>} : vector<16x128xbf16>, vector<128x128xbf16>, vector<16x128xf32> -> vector<16x128xf32>
    %c0_3 = arith.constant 0 : index
    %c0_4 = arith.constant 0 : index
    %4 = vector.load %arg4[%c0_3, %c0_4] : memref<1x128xf32, #tpu.memory_space<vmem>>, vector<1x128xf32>
    %5 = vector.broadcast %4 : vector<1x128xf32> to vector<16x128xf32>
    %6 = arith.addf %3, %5 : vector<16x128xf32>
    %c0_5 = arith.constant 0 : index
    %c0_6 = arith.constant 0 : index
    %7 = vector.load %arg2[%c0_5, %c0_6] : memref<16x128xf32, #tpu.memory_space<vmem>>, vector<16x128xf32>
    %8 = arith.truncf %7 : vector<16x128xf32> to vector<16x128xbf16>
    %c0_7 = arith.constant 0 : index
    %c0_8 = arith.constant 0 : index
    %9 = vector.load %arg5[%c0_7, %c0_8] : memref<128x128xbf16, #tpu.memory_space<vmem>>, vector<128x128xbf16>
    %cst_9 = arith.constant dense<0.000000e+00> : vector<16x128xf32>
    %10 = tpu.matmul %8, %9, %cst_9 {dimension_numbers = #tpu.dot_dimension_numbers<[1], [0], [0], [1], [0, 0, 1, 1], [], []>} : vector<16x128xbf16>, vector<128x128xbf16>, vector<16x128xf32> -> vector<16x128xf32>
    %c0_10 = arith.constant 0 : index
    %c0_11 = arith.constant 0 : index
    %11 = vector.load %arg6[%c0_10, %c0_11] : memref<1x128xf32, #tpu.memory_space<vmem>>, vector<1x128xf32>
    %12 = vector.broadcast %11 : vector<1x128xf32> to vector<16x128xf32>
    %13 = arith.addf %10, %12 : vector<16x128xf32>
    %14 = arith.mulf %6, %13 : vector<16x128xf32>
    %cst_12 = arith.constant dense<0.000000e+00> : vector<16xf32>
    %15 = vector.multi_reduction <add>, %14, %cst_12 [1] : vector<16x128xf32> to vector<16xf32>
    %16 = vector.shape_cast %15 : vector<16xf32> to vector<16x1xf32>
    %17 = arith.mulf %6, %6 : vector<16x128xf32>
    %cst_13 = arith.constant dense<0.000000e+00> : vector<16xf32>
    %18 = vector.multi_reduction <add>, %17, %cst_13 [1] : vector<16x128xf32> to vector<16xf32>
    %19 = vector.shape_cast %18 : vector<16xf32> to vector<16x1xf32>
    %20 = arith.mulf %13, %13 : vector<16x128xf32>
    %cst_14 = arith.constant dense<0.000000e+00> : vector<16xf32>
    %21 = vector.multi_reduction <add>, %20, %cst_14 [1] : vector<16x128xf32> to vector<16xf32>
    %22 = vector.shape_cast %21 : vector<16xf32> to vector<16x1xf32>
    %23 = math.rsqrt %19 : vector<16x1xf32>
    %24 = arith.mulf %16, %23 : vector<16x1xf32>
    %25 = math.rsqrt %22 : vector<16x1xf32>
    %26 = arith.mulf %24, %25 : vector<16x1xf32>
    %c0_15 = arith.constant 0 : index
    %c0_16 = arith.constant 0 : index
    %27 = vector.load %arg7[%c0_15, %c0_16] : memref<16x1xf32, #tpu.memory_space<vmem>>, vector<16x1xf32>
    tpu.vector_store %arg7[%c0_15, %c0_16], %26 {strides = array<i32>} : memref<16x1xf32, #tpu.memory_space<vmem>>, vector<16x1xf32>,
    return
  }
  func.func @transform_0(%arg0: i32) -> (i32, i32) {
    %c0_i32 = arith.constant 0 : i32
    %c0_i32_0 = arith.constant 0 : i32
    return %arg0, %c0_i32 : i32, i32
  }
  func.func @transform_1(%arg0: i32) -> (i32, i32) {
    %c0_i32 = arith.constant 0 : i32
    %c0_i32_0 = arith.constant 0 : i32
    return %arg0, %c0_i32 : i32, i32
  }
  func.func @transform_2(%arg0: i32) -> (i32, i32) {
    %c0_i32 = arith.constant 0 : i32
    %c0_i32_0 = arith.constant 0 : i32
    %c0_i32_1 = arith.constant 0 : i32
    return %c0_i32, %c0_i32_0 : i32, i32
  }
  func.func @transform_3(%arg0: i32) -> (i32, i32) {
    %c0_i32 = arith.constant 0 : i32
    %c0_i32_0 = arith.constant 0 : i32
    %c0_i32_1 = arith.constant 0 : i32
    return %c0_i32, %c0_i32_0 : i32, i32
  }
  func.func @transform_4(%arg0: i32) -> (i32, i32) {
    %c0_i32 = arith.constant 0 : i32
    %c0_i32_0 = arith.constant 0 : i32
    %c0_i32_1 = arith.constant 0 : i32
    return %c0_i32, %c0_i32_0 : i32, i32
  }
  func.func @transform_5(%arg0: i32) -> (i32, i32) {
    %c0_i32 = arith.constant 0 : i32
    %c0_i32_0 = arith.constant 0 : i32
    %c0_i32_1 = arith.constant 0 : i32
    return %c0_i32, %c0_i32_0 : i32, i32
  }
  func.func @transform_6(%arg0: i32) -> (i32, i32) {
    %c0_i32 = arith.constant 0 : i32
    %c0_i32_0 = arith.constant 0 : i32
    return %arg0, %c0_i32 : i32, i32
  }
}

</mosaic_0001>

<llo_original>
// kernel: tpu_custom_call.1
$region0: #{tpu_custom_call.1}
  #allocation0 [shape = 'u32[]', space=smem, size = 0x4, offset = 0x4, fixed_abs, tag = 'smem constant byte address 0x4 - core index']
  #allocation1 [shape = 'u32[144,128]{1,0:T(1,128)}', space=vmem, size = 0x12000, scoped, tag = 'internal scratch']
  %s0 = inlined_call_operand.hbm [shape: f32[16,128], index: 0, kind: input, shape index: {}]
  %s1 = inlined_call_operand.hbm [shape: f32[16,128], index: 1, kind: input, shape index: {}]
  %s2 = inlined_call_operand.hbm [shape: bf16[128,128], index: 2, kind: input, shape index: {}]
  %s3 = inlined_call_operand.vmem [shape: f32[1,128], index: 3, kind: input, shape index: {}]
  %s4 = inlined_call_operand.hbm [shape: bf16[128,128], index: 4, kind: input, shape index: {}]
  %s5 = inlined_call_operand.vmem [shape: f32[1,128], index: 5, kind: input, shape index: {}]
  %s6 = inlined_call_operand.vmem [shape: f32[16,1], index: 6, kind: output, shape index: {}]
  %s7 = sld [smem:[#allocation0]]
  $region50: #{tpu_custom_call.1} parent=0
    _
  %s9 = ssub.s32 1, %s7
  %s10 = scalar_select 0, %s9, %s7
  $region1: #{tpu_custom_call.1} parent=0
    #allocation2 [shape = 'u8[8192]{0}', space=vmem, size = 0x2000, scoped, tag = 'input window, operand 0, single buffered']
    #allocation3 [shape = 's32[1]{0}', space=sflag, size = 0x4, scoped, tag = 'scoped memory for tpu_custom_call.1']
    #allocation4 [shape = 'u8[8192]{0}', space=vmem, size = 0x2000, scoped, tag = 'input window, operand 1, single buffered']
    #allocation5 [shape = 's32[1]{0}', space=sflag, size = 0x4, scoped, tag = 'scoped memory for tpu_custom_call.1']
    #allocation6 [shape = 'u8[32768]{0}', space=vmem, size = 0x8000, scoped, tag = 'input window, operand 2, single buffered']
    #allocation7 [shape = 'u8[32768]{0}', space=vmem, size = 0x8000, scoped, tag = 'input window, operand 4, single buffered']
    #allocation8 [shape = 's32[1]{0}', space=sflag, size = 0x4, scoped, tag = 'scoped memory for tpu_custom_call.1']
    %11 = vsyncpa [#allocation3], 0
    %12 = vsyncpa [#allocation5], 0
    %13 = vsyncpa [#allocation8], 0
    // Predicated region
    $region2: #{tpu_custom_call.1} parent=1 // pred_check
      _
    $region3: #{tpu_custom_call.1} parent=1 // pred_check_branch
      %15 = sbr.rel (0) target = $region5
    $region4: #{tpu_custom_call.1} parent=1 // pred_region
      %s17 = ssub.s32 256, 256
      %18 = vsyncadd [#allocation3], %s17
      %s19 = sshll.u32 [#allocation2], 4
      %s20 = int_to_ptr.vmem [resolvable:$true] %s19
      %25 = dma.hbm_to_vmem [thread:$0]  %s0, 256, %s20, [#allocation3], 128, 128, 8
    $region5: #{tpu_custom_call.1} parent=1 // pred_fallthru
      _
    // Predicated region
    $region6: #{tpu_custom_call.1} parent=1 // pred_check
      _
    $region7: #{tpu_custom_call.1} parent=1 // pred_check_branch
      %27 = sbr.rel (0) target = $region9
    $region8: #{tpu_custom_call.1} parent=1 // pred_region
      %s29 = ssub.s32 256, 256
      %30 = vsyncadd [#allocation5], %s29
      %s31 = sshll.u32 [#allocation4], 4
      %s32 = int_to_ptr.vmem [resolvable:$true] %s31
      %37 = dma.hbm_to_vmem [thread:$0]  %s1, 256, %s32, [#allocation5], 128, 128, 8
    $region9: #{tpu_custom_call.1} parent=1 // pred_fallthru
      _
    // Predicated region
    $region10: #{tpu_custom_call.1} parent=1 // pred_check
      _
    $region11: #{tpu_custom_call.1} parent=1 // pred_check_branch
      %39 = sbr.rel (0) target = $region13
    $region12: #{tpu_custom_call.1} parent=1 // pred_region
      %s41 = ssub.s32 1024, 1024
      %42 = vsyncadd [#allocation5], %s41
      %s43 = sshll.u32 [#allocation6], 4
      %s44 = int_to_ptr.vmem [resolvable:$true] %s43
      %49 = dma.hbm_to_vmem [thread:$0]  %s2, 1024, %s44, [#allocation5], 64, 64, 4
    $region13: #{tpu_custom_call.1} parent=1 // pred_fallthru
      _
    // Predicated region
    $region14: #{tpu_custom_call.1} parent=1 // pred_check
      _
    $region15: #{tpu_custom_call.1} parent=1 // pred_check_branch
      %51 = sbr.rel (0) target = $region17
    $region16: #{tpu_custom_call.1} parent=1 // pred_region
      _
    $region17: #{tpu_custom_call.1} parent=1 // pred_fallthru
      _
    // Predicated region
    $region18: #{tpu_custom_call.1} parent=1 // pred_check
      _
    $region19: #{tpu_custom_call.1} parent=1 // pred_check_branch
      %53 = sbr.rel (0) target = $region21
    $region20: #{tpu_custom_call.1} parent=1 // pred_region
      %s55 = ssub.s32 1024, 1024
      %56 = vsyncadd [#allocation8], %s55
      %s57 = sshll.u32 [#allocation7], 4
      %s58 = int_to_ptr.vmem [resolvable:$true] %s57
      %63 = dma.hbm_to_vmem [thread:$0]  %s4, 1024, %s58, [#allocation8], 64, 64, 4
    $region21: #{tpu_custom_call.1} parent=1 // pred_fallthru
      _
    // Predicated region
    $region22: #{tpu_custom_call.1} parent=1 // pred_check
      _
    $region23: #{tpu_custom_call.1} parent=1 // pred_check_branch
      %65 = sbr.rel (0) target = $region25
    $region24: #{tpu_custom_call.1} parent=1 // pred_region
      _
    $region25: #{tpu_custom_call.1} parent=1 // pred_fallthru
      _
    // Predicated region
    $region26: #{tpu_custom_call.1} parent=1 // pred_check
      _
    $region27: #{tpu_custom_call.1} parent=1 // pred_check_branch
      %67 = sbr.rel (0) target = $region29
    $region28: #{tpu_custom_call.1} parent=1 // pred_region
      %68 = dma.done [#allocation3], 256
    $region29: #{tpu_custom_call.1} parent=1 // pred_fallthru
      _
    // Predicated region
    $region30: #{tpu_custom_call.1} parent=1 // pred_check
      _
    $region31: #{tpu_custom_call.1} parent=1 // pred_check_branch
      %70 = sbr.rel (0) target = $region33
    $region32: #{tpu_custom_call.1} parent=1 // pred_region
      %71 = dma.done [#allocation5], 256
    $region33: #{tpu_custom_call.1} parent=1 // pred_fallthru
      _
    // Predicated region
    $region34: #{tpu_custom_call.1} parent=1 // pred_check
      _
    $region35: #{tpu_custom_call.1} parent=1 // pred_check_branch
      %73 = sbr.rel (0) target = $region37
    $region36: #{tpu_custom_call.1} parent=1 // pred_region
      %74 = dma.done [#allocation5], 1024
    $region37: #{tpu_custom_call.1} parent=1 // pred_fallthru
      _
    // Predicated region
    $region38: #{tpu_custom_call.1} parent=1 // pred_check
      _
    $region39: #{tpu_custom_call.1} parent=1 // pred_check_branch
      %76 = sbr.rel (0) target = $region41
    $region40: #{tpu_custom_call.1} parent=1 // pred_region
      %77 = dma.done [#allocation8], 1024
    $region41: #{tpu_custom_call.1} parent=1 // pred_fallthru
      _
    %v79 = vld [vmem:[#allocation2] sm:$0xff]
    %v80 = vld [vmem:[#allocation2 + $0x8] sm:$0xff]
    %v81 = vpack.c.bf16 %v80, %v79
    %v82 = vld [vmem:[#allocation6] sm:$0xf]
    %v83 = vld [vmem:[#allocation6 + $0x4] sm:$0xf]
    %v84 = vld [vmem:[#allocation6 + $0x8] sm:$0xf]
    %v85 = vld [vmem:[#allocation6 + $0xc] sm:$0xf]
    %v86 = vld [vmem:[#allocation6 + $0x10] sm:$0xf]
    %v87 = vld [vmem:[#allocation6 + $0x14] sm:$0xf]
    %v88 = vld [vmem:[#allocation6 + $0x18] sm:$0xf]
    %v89 = vld [vmem:[#allocation6 + $0x1c] sm:$0xf]
    %v90 = vld [vmem:[#allocation6 + $0x20] sm:$0xf]
    %v91 = vld [vmem:[#allocation6 + $0x24] sm:$0xf]
    %v92 = vld [vmem:[#allocation6 + $0x28] sm:$0xf]
    %v93 = vld [vmem:[#allocation6 + $0x2c] sm:$0xf]
    %v94 = vld [vmem:[#allocation6 + $0x30] sm:$0xf]
    %v95 = vld [vmem:[#allocation6 + $0x34] sm:$0xf]
    %v96 = vld [vmem:[#allocation6 + $0x38] sm:$0xf]
    %v97 = vld [vmem:[#allocation6 + $0x3c] sm:$0xf]
    %v98 = vld [vmem:[%s3] sm:$0x1]
    %v100 = vlaneseq
    %v101 = vshrl.u32 %v100, 7
    %v102 = vsub.s32 0, %v101
    %v103 = vrot.slane %v98, %v102
    %v121 = vunpack.c.l.b16 %v82
    %v122 = vunpack.c.l.b16 %v83
    %v123 = vunpack.c.l.b16 %v84
    %v124 = vunpack.c.l.b16 %v85
    %v125 = vunpack.c.l.b16 %v86
    %v126 = vunpack.c.l.b16 %v87
    %v127 = vunpack.c.l.b16 %v88
    %v128 = vunpack.c.l.b16 %v89
    %v129 = vunpack.c.l.b16 %v90
    %v130 = vunpack.c.l.b16 %v91
    %v131 = vunpack.c.l.b16 %v92
    %v132 = vunpack.c.l.b16 %v93
    %v133 = vunpack.c.l.b16 %v94
    %v134 = vunpack.c.l.b16 %v95
    %v135 = vunpack.c.l.b16 %v96
    %v136 = vunpack.c.l.b16 %v97
    %v137 = vpack.c.b16 %v122, %v121
    %v138 = vpack.c.b16 %v124, %v123
    %v139 = vpack.c.b16 %v126, %v125
    %v140 = vpack.c.b16 %v128, %v127
    %v141 = vpack.c.b16 %v130, %v129
    %v142 = vpack.c.b16 %v132, %v131
    %v143 = vpack.c.b16 %v134, %v133
    %v144 = vpack.c.b16 %v136, %v135
    %153 = vmatprep.subr.bf16.mxu0 0
    %154 = vmatpush1.bf16.msra.mxu0 %v137
    %155 = vmatprep.subr.bf16.mxu0 0
    %156 = vmatpush1.bf16.msra.mxu0 %v138
    %157 = vmatprep.subr.bf16.mxu0 0
    %158 = vmatpush1.bf16.msra.mxu0 %v139
    %159 = vmatprep.subr.bf16.mxu0 0
    %160 = vmatpush1.bf16.msra.mxu0 %v140
    %161 = vmatprep.subr.bf16.mxu0 0
    %162 = vmatpush1.bf16.msra.mxu0 %v141
    %163 = vmatprep.subr.bf16.mxu0 0
    %164 = vmatpush1.bf16.msra.mxu0 %v142
    %165 = vmatprep.subr.bf16.mxu0 0
    %166 = vmatpush1.bf16.msra.mxu0 %v143
    %167 = vmatprep.subr.bf16.mxu0 0
    %168 = vmatpush1.bf16.msra.mxu0 %v144
    %169 = vmatprep.subr.bf16.mxu0 0
    %170 = vmatpush1.bf16.msra.mxu0 0
    %171 = vmatprep.subr.bf16.mxu0 0
    %172 = vmatpush1.bf16.msra.mxu0 0
    %173 = vmatprep.subr.bf16.mxu0 0
    %174 = vmatpush1.bf16.msra.mxu0 0
    %175 = vmatprep.subr.bf16.mxu0 0
    %176 = vmatpush1.bf16.msra.mxu0 0
    %177 = vmatprep.subr.bf16.mxu0 0
    %178 = vmatpush1.bf16.msra.mxu0 0
    %179 = vmatprep.subr.bf16.mxu0 0
    %180 = vmatpush1.bf16.msra.mxu0 0
    %181 = vmatprep.subr.bf16.mxu0 0
    %182 = vmatpush1.bf16.msra.mxu0 0
    %183 = vmatprep.subr.bf16.mxu0 0
    %184 = vmatpush1.bf16.msra.mxu0 0
    %185 = vmatprep.mubr.bf16.mxu0 0
    %186 = vmatmul.mubr.bf16.gmra.mrb[0].mxu0 %v81
    %v187 = vpop.f32.mrb[0].mxu0
    %v188 = vadd.f32 %v103, %v187
    %v189 = vpop.f32.mrb[0].mxu0
    %v190 = vpop.f32.mrb[0].mxu0
    %v191 = vadd.f32 %v103, %v190
    %v192 = vpop.f32.mrb[0].mxu0
    %193 = vdwg.mxu0
    %v194 = vld [vmem:[#allocation4] sm:$0xff]
    %v195 = vld [vmem:[#allocation4 + $0x8] sm:$0xff]
    %v196 = vpack.c.bf16 %v195, %v194
    %v197 = vld [vmem:[#allocation7] sm:$0xf]
    %v198 = vld [vmem:[#allocation7 + $0x4] sm:$0xf]
    %v199 = vld [vmem:[#allocation7 + $0x8] sm:$0xf]
    %v200 = vld [vmem:[#allocation7 + $0xc] sm:$0xf]
    %v201 = vld [vmem:[#allocation7 + $0x10] sm:$0xf]
    %v202 = vld [vmem:[#allocation7 + $0x14] sm:$0xf]
    %v203 = vld [vmem:[#allocation7 + $0x18] sm:$0xf]
    %v204 = vld [vmem:[#allocation7 + $0x1c] sm:$0xf]
    %v205 = vld [vmem:[#allocation7 + $0x20] sm:$0xf]
    %v206 = vld [vmem:[#allocation7 + $0x24] sm:$0xf]
    %v207 = vld [vmem:[#allocation7 + $0x28] sm:$0xf]
    %v208 = vld [vmem:[#allocation7 + $0x2c] sm:$0xf]
    %v209 = vld [vmem:[#allocation7 + $0x30] sm:$0xf]
    %v210 = vld [vmem:[#allocation7 + $0x34] sm:$0xf]
    %v211 = vld [vmem:[#allocation7 + $0x38] sm:$0xf]
    %v212 = vld [vmem:[#allocation7 + $0x3c] sm:$0xf]
    %v213 = vld [vmem:[%s5] sm:$0x1]
    %v215 = vlaneseq
    %v216 = vshrl.u32 %v215, 7
    %v217 = vsub.s32 0, %v216
    %v218 = vrot.slane %v213, %v217
    %v236 = vunpack.c.l.b16 %v197
    %v237 = vunpack.c.l.b16 %v198
    %v238 = vunpack.c.l.b16 %v199
    %v239 = vunpack.c.l.b16 %v200
    %v240 = vunpack.c.l.b16 %v201
    %v241 = vunpack.c.l.b16 %v202
    %v242 = vunpack.c.l.b16 %v203
    %v243 = vunpack.c.l.b16 %v204
    %v244 = vunpack.c.l.b16 %v205
    %v245 = vunpack.c.l.b16 %v206
    %v246 = vunpack.c.l.b16 %v207
    %v247 = vunpack.c.l.b16 %v208
    %v248 = vunpack.c.l.b16 %v209
    %v249 = vunpack.c.l.b16 %v210
    %v250 = vunpack.c.l.b16 %v211
    %v251 = vunpack.c.l.b16 %v212
    %v252 = vpack.c.b16 %v237, %v236
    %v253 = vpack.c.b16 %v239, %v238
    %v254 = vpack.c.b16 %v241, %v240
    %v255 = vpack.c.b16 %v243, %v242
    %v256 = vpack.c.b16 %v245, %v244
    %v257 = vpack.c.b16 %v247, %v246
    %v258 = vpack.c.b16 %v249, %v248
    %v259 = vpack.c.b16 %v251, %v250
    %268 = vmatprep.subr.bf16.mxu0 0
    %269 = vmatpush1.bf16.msra.mxu0 %v252
    %270 = vmatprep.subr.bf16.mxu0 0
    %271 = vmatpush1.bf16.msra.mxu0 %v253
    %272 = vmatprep.subr.bf16.mxu0 0
    %273 = vmatpush1.bf16.msra.mxu0 %v254
    %274 = vmatprep.subr.bf16.mxu0 0
    %275 = vmatpush1.bf16.msra.mxu0 %v255
    %276 = vmatprep.subr.bf16.mxu0 0
    %277 = vmatpush1.bf16.msra.mxu0 %v256
    %278 = vmatprep.subr.bf16.mxu0 0
    %279 = vmatpush1.bf16.msra.mxu0 %v257
    %280 = vmatprep.subr.bf16.mxu0 0
    %281 = vmatpush1.bf16.msra.mxu0 %v258
    %282 = vmatprep.subr.bf16.mxu0 0
    %283 = vmatpush1.bf16.msra.mxu0 %v259
    %284 = vmatprep.subr.bf16.mxu0 0
    %285 = vmatpush1.bf16.msra.mxu0 0
    %286 = vmatprep.subr.bf16.mxu0 0
    %287 = vmatpush1.bf16.msra.mxu0 0
    %288 = vmatprep.subr.bf16.mxu0 0
    %289 = vmatpush1.bf16.msra.mxu0 0
    %290 = vmatprep.subr.bf16.mxu0 0
    %291 = vmatpush1.bf16.msra.mxu0 0
    %292 = vmatprep.subr.bf16.mxu0 0
    %293 = vmatpush1.bf16.msra.mxu0 0
    %294 = vmatprep.subr.bf16.mxu0 0
    %295 = vmatpush1.bf16.msra.mxu0 0
    %296 = vmatprep.subr.bf16.mxu0 0
    %297 = vmatpush1.bf16.msra.mxu0 0
    %298 = vmatprep.subr.bf16.mxu0 0
    %299 = vmatpush1.bf16.msra.mxu0 0
    %300 = vmatprep.mubr.bf16.mxu0 0
    %301 = vmatmul.mubr.bf16.gmra.mrb[0].mxu0 %v196
    %v302 = vpop.f32.mrb[0].mxu0
    %v303 = vadd.f32 %v218, %v302
    %v304 = vpop.f32.mrb[0].mxu0
    %v305 = vpop.f32.mrb[0].mxu0
    %v306 = vadd.f32 %v218, %v305
    %v307 = vpop.f32.mrb[0].mxu0
    %308 = vdwg.mxu0
    %v309 = vmul.f32 %v188, %v303
    %v310 = vmul.f32 %v191, %v306
    %311 = vadd.xlane.f32.xlu0 %v309
    %v312 = vpop.xlane.xlu0 %311
    %313 = vadd.xlane.f32.xlu0 %v310
    %v314 = vpop.xlane.xlu0 %313
    %v315 = vmul.f32 %v188, %v188
    %v316 = vmul.f32 %v191, %v191
    %317 = vadd.xlane.f32.xlu0 %v315
    %v318 = vpop.xlane.xlu0 %317
    %319 = vadd.xlane.f32.xlu0 %v316
    %v320 = vpop.xlane.xlu0 %319
    %v321 = vmul.f32 %v303, %v303
    %v322 = vmul.f32 %v306, %v306
    %323 = vadd.xlane.f32.xlu0 %v321
    %v324 = vpop.xlane.xlu0 %323
    %325 = vadd.xlane.f32.xlu0 %v322
    %v326 = vpop.xlane.xlu0 %325
    %v327 = vrsqrt.pop %v318
    %v328 = vrsqrt.pop %v320
    %v329 = vmul.f32 %v312, %v327
    %v330 = vmul.f32 %v314, %v328
    %v331 = vrsqrt.pop %v324
    %v332 = vrsqrt.pop %v326
    %v333 = vmul.f32 %v329, %v331
    %v334 = vmul.f32 %v330, %v332
    %vm335 = vcmask 7168
    %336 = vst.msk [vmem:[%s6] sm:$0xff] %vm335, %v333
    %337 = vst.msk [vmem:[%s6 + $0x8] sm:$0xff] %vm335, %v334
    // Predicated region
    $region42: #{tpu_custom_call.1} parent=1 // pred_check
      _
    $region43: #{tpu_custom_call.1} parent=1 // pred_check_branch
      %339 = sbr.rel (0) target = $region45
    $region44: #{tpu_custom_call.1} parent=1 // pred_region
      _
    $region45: #{tpu_custom_call.1} parent=1 // pred_fallthru
      _
    // Predicated region
    $region46: #{tpu_custom_call.1} parent=1 // pred_check
      _
    $region47: #{tpu_custom_call.1} parent=1 // pred_check_branch
      %341 = sbr.rel (0) target = $region49
    $region48: #{tpu_custom_call.1} parent=1 // pred_region
      _
    $region49: #{tpu_custom_call.1} parent=1 // pred_fallthru
      _
    %342 = vsyncpa [#allocation3], 1
    %343 = vsyncpa [#allocation5], 1
    %344 = vsyncpa [#allocation8], 1

</llo_original>
